<compile_context>
chip_gen: v7x
topology: tpu7x:2x2x1
jax: 0.10.0
libtpu: 0.0.40
codegen_flags: <defaults>
</compile_context>

<pallas_src>
import functools
import math

import jax
import jax.numpy as jnp
from jax.experimental import pallas as pl
from jax.experimental.pallas import tpu as pltpu


def _round_up(x, m):
    return (x + m - 1) // m * m


def _cross_attn_kernel(x_ref, enc_ref, wq_ref, bq_ref, wkv_ref, bkv_ref,
                       o_ref, k_ref, v_ref, *, scale, approx_recip):
    cdt = x_ref.dtype  # compute dtype (bf16 by default)

    # --- K|V projection: once per batch element, cached in VMEM scratch. ---
    @pl.when(pl.program_id(1) == 0)
    def _():
        kv = jnp.dot(enc_ref[0], wkv_ref[...],
                     preferred_element_type=jnp.float32) + bkv_ref[...]
        do_p = kv.shape[1] // 2          # clean 128-lane boundary
        k_ref[...] = kv[:, :do_p].astype(cdt)
        v_ref[...] = kv[:, do_p:].astype(cdt)

    # --- Q projection for this q-row tile; fold the softmax scale into q. ---
    q = (jnp.dot(x_ref[0], wq_ref[...], preferred_element_type=jnp.float32)
         + bq_ref[...]) * scale                           # (block_q, Do) f32

    # scores = q @ k^T : contract the feature axis directly (no materialized
    # K^T — the MXU handles the transposed-RHS contraction).
    s = jax.lax.dot_general(q.astype(cdt), k_ref[...],
                            (((1,), (1,)), ((), ())),
                            preferred_element_type=jnp.float32)  # (block_q, Sk)

    # Numerically stable softmax over keys (f32 on VPU/EUP).
    m = jnp.max(s, axis=-1, keepdims=True)
    p = jnp.exp(s - m)
    denom = jnp.sum(p, axis=-1, keepdims=True)

    # attn @ V in compute dtype, f32 accumulation, EUP reciprocal normalize.
    out = jnp.dot(p.astype(cdt), v_ref[...], preferred_element_type=jnp.float32)
    inv = pl.reciprocal(denom, approx=approx_recip)
    o_ref[0] = (out * inv).astype(o_ref.dtype)


def cross_attention(encoder_output, x, params, *, block_q=256,
                    compute_dtype=jnp.bfloat16):
    """params = (wq, bq, wk, bk, wv, bv); returns (batch, seq_q, output_dim)."""
    wq, bq, wk, bk, wv, bv = params
    out_dtype = x.dtype
    B, Sq, Dq = x.shape
    Be, Sk, De = encoder_output.shape
    assert B == Be, "batch mismatch between x and encoder_output"
    Do = wq.shape[1]
    scale = 1.0 / math.sqrt(Do)          # torch: / sqrt(key.shape[-1])

    if compute_dtype is None:
        compute_dtype = jnp.float32
    compute_dtype = jnp.dtype(compute_dtype)

    # Lane-density guard: pad output_dim to a multiple of 128 (zero columns in
    # Wq/Wk cancel in q.k, zero V columns are sliced off), keep the ORIGINAL
    # Do in the softmax scale.
    Do_p = _round_up(Do, 128)
    if Do_p != Do:
        pad = Do_p - Do
        wq = jnp.pad(wq, ((0, 0), (0, pad))); bq = jnp.pad(bq, (0, pad))
        wk = jnp.pad(wk, ((0, 0), (0, pad))); bk = jnp.pad(bk, (0, pad))
        wv = jnp.pad(wv, ((0, 0), (0, pad))); bv = jnp.pad(bv, (0, pad))

    # Fused K|V projection weights: one (De, 2*Do) matmul fills the MXU N dim.
    wkv = jnp.concatenate([wk, wv], axis=1)
    bkv = jnp.concatenate([bk, bv]).reshape(1, 2 * Do_p).astype(jnp.float32)
    bq2 = bq.reshape(1, Do_p).astype(jnp.float32)

    # Low-precision MXU inputs (default bf16); f32 accumulation stays on.
    x_c = x.astype(compute_dtype)
    enc_c = encoder_output.astype(compute_dtype)
    wq_c = wq.astype(compute_dtype)
    wkv_c = wkv.astype(compute_dtype)

    # block_q: multiple of the dtype sublane packing (16 bf16 / 8 f32); pad
    # ragged seq_q to the tile instead of emitting tiny tiles.
    pack = 16 if compute_dtype == jnp.bfloat16 else 8
    block_q = max(pack, (min(block_q, _round_up(Sq, pack)) // pack) * pack)
    sq_pad = _round_up(Sq, block_q)
    if sq_pad != Sq:
        x_c = jnp.pad(x_c, ((0, 0), (0, sq_pad - Sq), (0, 0)))
    n_q = sq_pad // block_q
    grid = (B, n_q)

    # Explicit VMEM budget from the real per-step footprint (+margin), so the
    # kernel is not gated by the 16/32 MiB scoped defaults on v5e/v7x.
    cbytes = compute_dtype.itemsize
    obytes = jnp.dtype(out_dtype).itemsize
    footprint = (
        2 * block_q * Dq * cbytes                      # x tile (double-buffered)
        + 2 * Sk * De * cbytes                         # encoder slab
        + 2 * (Dq * Do_p + De * 2 * Do_p) * cbytes     # Wq + Wkv
        + 2 * 3 * Do_p * 4                             # biases
        + 2 * block_q * Do_p * obytes                  # out tile
        + 2 * Sk * Do_p * cbytes                       # cached K/V scratch
        + (2 * Sk * Do_p + 2 * block_q * Sk + 2 * block_q * Do_p) * 4  # f32 temps
    )
    vmem_limit = int(min(2 * footprint + (4 << 20), 64 << 20))

    # Advisory cost estimate so XLA can schedule around the kernel.
    flops = 2 * B * (sq_pad * Dq * Do_p            # Q projection
                     + Sk * De * 2 * Do_p          # fused K|V projection (once/batch)
                     + 2 * sq_pad * Sk * Do_p)     # QK^T + PV
    bytes_accessed = (x_c.size * cbytes + enc_c.size * cbytes
                      + (wq_c.size + wkv_c.size) * cbytes
                      + (bq2.size + bkv.size) * 4
                      + B * sq_pad * Do_p * obytes)
    cost = pl.CostEstimate(flops=int(flops),
                           transcendentals=int(B * sq_pad * Sk),
                           bytes_accessed=int(bytes_accessed))

    out = pl.pallas_call(
        functools.partial(_cross_attn_kernel, scale=scale,
                          approx_recip=(compute_dtype != jnp.float32)),
        out_shape=jax.ShapeDtypeStruct((B, sq_pad, Do_p), out_dtype),
        grid_spec=pltpu.PrefetchScalarGridSpec(
            num_scalar_prefetch=0,
            grid=grid,
            in_specs=[
                pl.BlockSpec((1, block_q, Dq), lambda b, qi: (b, qi, 0)),   # x q-tile
                pl.BlockSpec((1, Sk, De), lambda b, qi: (b, 0, 0)),         # encoder slab
                pl.BlockSpec((Dq, Do_p), lambda b, qi: (0, 0)),             # Wq (resident)
                pl.BlockSpec((1, Do_p), lambda b, qi: (0, 0)),              # bq
                pl.BlockSpec((De, 2 * Do_p), lambda b, qi: (0, 0)),         # [Wk|Wv] (resident)
                pl.BlockSpec((1, 2 * Do_p), lambda b, qi: (0, 0)),          # [bk|bv]
            ],
            out_specs=pl.BlockSpec((1, block_q, Do_p), lambda b, qi: (b, qi, 0)),
            scratch_shapes=[pltpu.VMEM((Sk, Do_p), compute_dtype),          # cached K
                            pltpu.VMEM((Sk, Do_p), compute_dtype)],         # cached V
        ),
        compiler_params=pltpu.CompilerParams(
            dimension_semantics=("parallel", "arbitrary"),   # qi carries the K/V cache
            vmem_limit_bytes=vmem_limit),
        cost_estimate=cost,
    )(x_c, enc_c, wq_c, bq2, wkv_c, bkv)

    return out[:, :Sq, :Do]


def init_params(key, encoder_output_dim, output_dim, masked_attention_dim,
                dtype=jnp.float32):
    """Deterministic init mimicking nn.Linear default U(-1/sqrt(fan_in), +)."""
    kvw, kvb, kkw, kkb, kqw, kqb = jax.random.split(key, 6)
    be = 1.0 / math.sqrt(encoder_output_dim)
    bm = 1.0 / math.sqrt(masked_attention_dim)
    # stored pre-transposed relative to torch: Linear.weight is (out, in) -> here (in, out)
    wv = jax.random.uniform(kvw, (encoder_output_dim, output_dim), dtype, -be, be)
    bv = jax.random.uniform(kvb, (output_dim,), dtype, -be, be)
    wk = jax.random.uniform(kkw, (encoder_output_dim, output_dim), dtype, -be, be)
    bk = jax.random.uniform(kkb, (output_dim,), dtype, -be, be)
    wq = jax.random.uniform(kqw, (masked_attention_dim, output_dim), dtype, -bm, bm)
    bq = jax.random.uniform(kqb, (output_dim,), dtype, -bm, bm)
    return wq, bq, wk, bk, wv, bv


def cross_attention_ref(encoder_output, x, params):
    """Pure-JAX reference (high-precision matmuls)."""
    wq, bq, wk, bk, wv, bv = params
    hp = jax.lax.Precision.HIGHEST
    q = jnp.dot(x, wq, precision=hp) + bq
    k = jnp.dot(encoder_output, wk, precision=hp) + bk
    v = jnp.dot(encoder_output, wv, precision=hp) + bv
    s = jnp.einsum("bqd,bkd->bqk", q, k, precision=hp) / math.sqrt(wq.shape[1])
    a = jax.nn.softmax(s, axis=-1)
    return jnp.einsum("bqk,bkd->bqd", a, v, precision=hp)


if __name__ == "__main__":
    key = jax.random.PRNGKey(0)
    batch = 2
    seq_q = 8                 # decoder / masked-attention sequence length
    seq_kv = 16               # encoder sequence length
    encoder_output_dim = 64
    masked_attention_dim = 32
    output_dim = 128          # lane-dense (multiple of 128) attention width

    kx, ke, kp = jax.random.split(key, 3)
    x = jax.random.normal(kx, (batch, seq_q, masked_attention_dim), jnp.float32)
    enc = jax.random.normal(ke, (batch, seq_kv, encoder_output_dim), jnp.float32)
    params = init_params(kp, encoder_output_dim, output_dim, masked_attention_dim)

    ref = cross_attention_ref(enc, x, params)

    # Default path: bf16 MXU inputs, f32 accumulation — loose check.
    out_bf16 = jax.block_until_ready(cross_attention(enc, x, params))
    assert out_bf16.shape == (batch, seq_q, output_dim)
    assert jnp.allclose(out_bf16, ref, atol=1e-1, rtol=1e-1), \
        float(jnp.max(jnp.abs(out_bf16 - ref)))

    # f32 compute path (exact reciprocal) — tight check against the reference.
    out_f32 = jax.block_until_ready(
        cross_attention(enc, x, params, compute_dtype=jnp.float32))
    assert jnp.allclose(out_f32, ref, atol=1e-4, rtol=1e-4), \
        float(jnp.max(jnp.abs(out_f32 - ref)))

    print("KERNEL_OK")
</pallas_src>

<mosaic_0001>
module attributes {stable_mosaic.version = 11 : i64} {
  func.func @_cross_attn_kernel(%arg0: i32, %arg1: i32, %arg2: memref<1x16x32xbf16, #tpu.memory_space<vmem>>, %arg3: memref<1x16x64xbf16, #tpu.memory_space<vmem>>, %arg4: memref<32x128xbf16, #tpu.memory_space<vmem>>, %arg5: memref<1x128xf32, #tpu.memory_space<vmem>>, %arg6: memref<64x256xbf16, #tpu.memory_space<vmem>>, %arg7: memref<1x256xf32, #tpu.memory_space<vmem>>, %arg8: memref<1x16x128xf32, #tpu.memory_space<vmem>>, %arg9: memref<16x128xbf16, #tpu.memory_space<vmem>>, %arg10: memref<16x128xbf16, #tpu.memory_space<vmem>>) attributes {dimension_semantics = [#tpu.dimension_semantics<parallel>, #tpu.dimension_semantics<arbitrary>], iteration_bounds = array<i64: 2, 1>, scalar_prefetch = 0 : i64, scratch_operands = 2 : i64, tpu.core_type = #tpu.core_type<tc>, window_params = [{transform_indices = @transform_0, window_bounds = array<i64: 1, 16, 32>}, {transform_indices = @transform_1, window_bounds = array<i64: 1, 16, 64>}, {pipeline_mode = #tpu.pipeline_mode<synchronous>, transform_indices = @transform_2, window_bounds = array<i64: 32, 128>}, {pipeline_mode = #tpu.pipeline_mode<synchronous>, transform_indices = @transform_3, window_bounds = array<i64: 1, 128>}, {pipeline_mode = #tpu.pipeline_mode<synchronous>, transform_indices = @transform_4, window_bounds = array<i64: 64, 256>}, {pipeline_mode = #tpu.pipeline_mode<synchronous>, transform_indices = @transform_5, window_bounds = array<i64: 1, 256>}, {transform_indices = @transform_6, window_bounds = array<i64: 1, 16, 128>}]} {
    %c0_i32 = arith.constant 0 : i32
    %0 = arith.cmpi eq, %arg1, %c0_i32 : i32
    %1 = arith.extui %0 : i1 to i32
    %c0_i32_0 = arith.constant 0 : i32
    %2 = arith.cmpi ne, %1, %c0_i32_0 : i32
    scf.if %2 {
      %c0_19 = arith.constant 0 : index
      %c0_20 = arith.constant 0 : index
      %c0_21 = arith.constant 0 : index
      %31 = vector.load %arg3[%c0_19, %c0_20, %c0_21] : memref<1x16x64xbf16, #tpu.memory_space<vmem>>, vector<1x16x64xbf16>
      %32 = vector.shape_cast %31 : vector<1x16x64xbf16> to vector<16x64xbf16>
      %c0_22 = arith.constant 0 : index
      %c0_23 = arith.constant 0 : index
      %33 = vector.load %arg6[%c0_22, %c0_23] : memref<64x256xbf16, #tpu.memory_space<vmem>>, vector<64x256xbf16>
      %cst_24 = arith.constant dense<0.000000e+00> : vector<16x256xf32>
      %34 = tpu.matmul %32, %33, %cst_24 {dimension_numbers = #tpu.dot_dimension_numbers<[1], [0], [0], [1], [0, 0, 1, 1], [], []>} : vector<16x64xbf16>, vector<64x256xbf16>, vector<16x256xf32> -> vector<16x256xf32>
      %c0_25 = arith.constant 0 : index
      %c0_26 = arith.constant 0 : index
      %35 = vector.load %arg7[%c0_25, %c0_26] : memref<1x256xf32, #tpu.memory_space<vmem>>, vector<1x256xf32>
      %36 = vector.broadcast %35 : vector<1x256xf32> to vector<16x256xf32>
      %37 = arith.addf %34, %36 : vector<16x256xf32>
      %38 = vector.extract_strided_slice %37 {offsets = [0, 0], sizes = [16, 128], strides = [1, 1]} : vector<16x256xf32> to vector<16x128xf32>
      %39 = arith.truncf %38 : vector<16x128xf32> to vector<16x128xbf16>
      %c0_27 = arith.constant 0 : index
      %c0_28 = arith.constant 0 : index
      %40 = vector.load %arg9[%c0_27, %c0_28] : memref<16x128xbf16, #tpu.memory_space<vmem>>, vector<16x128xbf16>
      tpu.vector_store %arg9[%c0_27, %c0_28], %39 {strides = array<i32>} : memref<16x128xbf16, #tpu.memory_space<vmem>>, vector<16x128xbf16>,
      %41 = vector.extract_strided_slice %37 {offsets = [0, 128], sizes = [16, 128], strides = [1, 1]} : vector<16x256xf32> to vector<16x128xf32>
      %42 = arith.truncf %41 : vector<16x128xf32> to vector<16x128xbf16>
      %c0_29 = arith.constant 0 : index
      %c0_30 = arith.constant 0 : index
      %43 = vector.load %arg10[%c0_29, %c0_30] : memref<16x128xbf16, #tpu.memory_space<vmem>>, vector<16x128xbf16>
      tpu.vector_store %arg10[%c0_29, %c0_30], %42 {strides = array<i32>} : memref<16x128xbf16, #tpu.memory_space<vmem>>, vector<16x128xbf16>,
    } else {
    }
    %c0 = arith.constant 0 : index
    %c0_1 = arith.constant 0 : index
    %c0_2 = arith.constant 0 : index
    %3 = vector.load %arg2[%c0, %c0_1, %c0_2] : memref<1x16x32xbf16, #tpu.memory_space<vmem>>, vector<1x16x32xbf16>
    %4 = vector.shape_cast %3 : vector<1x16x32xbf16> to vector<16x32xbf16>
    %c0_3 = arith.constant 0 : index
    %c0_4 = arith.constant 0 : index
    %5 = vector.load %arg4[%c0_3, %c0_4] : memref<32x128xbf16, #tpu.memory_space<vmem>>, vector<32x128xbf16>
    %cst = arith.constant dense<0.000000e+00> : vector<16x128xf32>
    %6 = tpu.matmul %4, %5, %cst {dimension_numbers = #tpu.dot_dimension_numbers<[1], [0], [0], [1], [0, 0, 1, 1], [], []>} : vector<16x32xbf16>, vector<32x128xbf16>, vector<16x128xf32> -> vector<16x128xf32>
    %c0_5 = arith.constant 0 : index
    %c0_6 = arith.constant 0 : index
    %7 = vector.load %arg5[%c0_5, %c0_6] : memref<1x128xf32, #tpu.memory_space<vmem>>, vector<1x128xf32>
    %8 = vector.broadcast %7 : vector<1x128xf32> to vector<16x128xf32>
    %9 = arith.addf %6, %8 : vector<16x128xf32>
    %cst_7 = arith.constant 0.0883883461 : f32
    %10 = vector.broadcast %cst_7 : f32 to vector<16x128xf32>
    %11 = arith.mulf %9, %10 : vector<16x128xf32>
    %12 = arith.truncf %11 : vector<16x128xf32> to vector<16x128xbf16>
    %c0_8 = arith.constant 0 : index
    %c0_9 = arith.constant 0 : index
    %13 = vector.load %arg9[%c0_8, %c0_9] : memref<16x128xbf16, #tpu.memory_space<vmem>>, vector<16x128xbf16>
    %cst_10 = arith.constant dense<0.000000e+00> : vector<16x16xf32>
    %14 = tpu.matmul %12, %13, %cst_10 {dimension_numbers = #tpu.dot_dimension_numbers<[1], [1], [0], [0], [0, 0, 1, 0], [], []>} : vector<16x128xbf16>, vector<16x128xbf16>, vector<16x16xf32> -> vector<16x16xf32>
    %cst_11 = arith.constant dense<0xFF800000> : vector<16xf32>
    %15 = vector.multi_reduction <maximumf>, %14, %cst_11 [1] : vector<16x16xf32> to vector<16xf32>
    %16 = vector.shape_cast %15 : vector<16xf32> to vector<16x1xf32>
    %17 = vector.broadcast %16 : vector<16x1xf32> to vector<16x16xf32>
    %18 = arith.subf %14, %17 : vector<16x16xf32>
    %19 = math.exp %18 : vector<16x16xf32>
    %cst_12 = arith.constant dense<0.000000e+00> : vector<16xf32>
    %20 = vector.multi_reduction <add>, %19, %cst_12 [1] : vector<16x16xf32> to vector<16xf32>
    %21 = vector.shape_cast %20 : vector<16xf32> to vector<16x1xf32>
    %22 = arith.truncf %19 : vector<16x16xf32> to vector<16x16xbf16>
    %c0_13 = arith.constant 0 : index
    %c0_14 = arith.constant 0 : index
    %23 = vector.load %arg10[%c0_13, %c0_14] : memref<16x128xbf16, #tpu.memory_space<vmem>>, vector<16x128xbf16>
    %cst_15 = arith.constant dense<0.000000e+00> : vector<16x128xf32>
    %24 = tpu.matmul %22, %23, %cst_15 {dimension_numbers = #tpu.dot_dimension_numbers<[1], [0], [0], [1], [0, 0, 1, 1], [], []>} : vector<16x16xbf16>, vector<16x128xbf16>, vector<16x128xf32> -> vector<16x128xf32>
    %25 = tpu.reciprocal %21 {approx = true} : vector<16x1xf32> -> vector<16x1xf32>
    %26 = vector.broadcast %25 : vector<16x1xf32> to vector<16x128xf32>
    %27 = arith.mulf %24, %26 : vector<16x128xf32>
    %c0_16 = arith.constant 0 : index
    %c0_17 = arith.constant 0 : index
    %c0_18 = arith.constant 0 : index
    %28 = vector.load %arg8[%c0_16, %c0_17, %c0_18] : memref<1x16x128xf32, #tpu.memory_space<vmem>>, vector<1x16x128xf32>
    %29 = vector.shape_cast %28 : vector<1x16x128xf32> to vector<16x128xf32>
    %30 = vector.shape_cast %27 : vector<16x128xf32> to vector<1x16x128xf32>
    tpu.vector_store %arg8[%c0_16, %c0_17, %c0_18], %30 {strides = array<i32>} : memref<1x16x128xf32, #tpu.memory_space<vmem>>, vector<1x16x128xf32>,
    return
  }
  func.func @transform_0(%arg0: i32, %arg1: i32) -> (i32, i32, i32) {
    %c0_i32 = arith.constant 0 : i32
    %c0_i32_0 = arith.constant 0 : i32
    return %arg0, %arg1, %c0_i32 : i32, i32, i32
  }
  func.func @transform_1(%arg0: i32, %arg1: i32) -> (i32, i32, i32) {
    %c0_i32 = arith.constant 0 : i32
    %c0_i32_0 = arith.constant 0 : i32
    %c0_i32_1 = arith.constant 0 : i32
    return %arg0, %c0_i32, %c0_i32_0 : i32, i32, i32
  }
  func.func @transform_2(%arg0: i32, %arg1: i32) -> (i32, i32) {
    %c0_i32 = arith.constant 0 : i32
    %c0_i32_0 = arith.constant 0 : i32
    %c0_i32_1 = arith.constant 0 : i32
    return %c0_i32, %c0_i32_0 : i32, i32
  }
  func.func @transform_3(%arg0: i32, %arg1: i32) -> (i32, i32) {
    %c0_i32 = arith.constant 0 : i32
    %c0_i32_0 = arith.constant 0 : i32
    %c0_i32_1 = arith.constant 0 : i32
    return %c0_i32, %c0_i32_0 : i32, i32
  }
  func.func @transform_4(%arg0: i32, %arg1: i32) -> (i32, i32) {
    %c0_i32 = arith.constant 0 : i32
    %c0_i32_0 = arith.constant 0 : i32
    %c0_i32_1 = arith.constant 0 : i32
    return %c0_i32, %c0_i32_0 : i32, i32
  }
  func.func @transform_5(%arg0: i32, %arg1: i32) -> (i32, i32) {
    %c0_i32 = arith.constant 0 : i32
    %c0_i32_0 = arith.constant 0 : i32
    %c0_i32_1 = arith.constant 0 : i32
    return %c0_i32, %c0_i32_0 : i32, i32
  }
  func.func @transform_6(%arg0: i32, %arg1: i32) -> (i32, i32, i32) {
    %c0_i32 = arith.constant 0 : i32
    %c0_i32_0 = arith.constant 0 : i32
    return %arg0, %arg1, %c0_i32 : i32, i32, i32
  }
}

</mosaic_0001>

<llo_original>
// kernel: tpu_custom_call.1
$region0: #{tpu_custom_call.1}
  #allocation0 [shape = 'u32[]', space=smem, size = 0x4, offset = 0x4, fixed_abs, tag = 'smem constant byte address 0x4 - core index']
  #allocation1 [shape = 'u32[144,128]{1,0:T(1,128)}', space=vmem, size = 0x12000, scoped, tag = 'internal scratch']
  #allocation2 [shape = 'bf16[16,128]{1,0:T(16,128)(2,1)}', space=vmem, size = 0x1000, scoped, tag = 'scratch operand']
  #allocation3 [shape = 'bf16[16,128]{1,0:T(16,128)(2,1)}', space=vmem, size = 0x1000, scoped, tag = 'scratch operand']
  %s0 = inlined_call_operand.hbm [shape: bf16[2,16,32], index: 0, kind: input, shape index: {}]
  %s1 = inlined_call_operand.hbm [shape: bf16[2,16,64], index: 1, kind: input, shape index: {}]
  %s2 = inlined_call_operand.hbm [shape: bf16[32,128], index: 2, kind: input, shape index: {}]
  %s3 = inlined_call_operand.vmem [shape: f32[1,128], index: 3, kind: input, shape index: {}]
  %s4 = inlined_call_operand.hbm [shape: bf16[64,256], index: 4, kind: input, shape index: {}]
  %s5 = inlined_call_operand.vmem [shape: f32[1,256], index: 5, kind: input, shape index: {}]
  %s6 = inlined_call_operand.hbm [shape: f32[2,16,128], index: 6, kind: output, shape index: {}]
  %s7 = sld [smem:[#allocation0]]
  $region77: #{tpu_custom_call.1} parent=0
    _
  %s9 = ssub.s32 1, %s7
  %s10 = scalar_select 0, %s9, %s7
  $region1: #{tpu_custom_call.1} parent=0
    #allocation4 [shape = 'u8[8192]{0}', space=vmem, size = 0x2000, scoped, tag = 'input window, operand 0']
    #allocation5 [shape = 's32[2]{0}', space=sflag, size = 0x8, scoped, tag = 'scoped memory for tpu_custom_call.1']
    #allocation6 [shape = 's32[2]{0}', space=sflag, size = 0x8, scoped, tag = 'scoped memory for tpu_custom_call.1']
    #allocation7 [shape = 'u8[8192]{0}', space=vmem, size = 0x2000, scoped, tag = 'input window, operand 1']
    #allocation8 [shape = 's32[2]{0}', space=sflag, size = 0x8, scoped, tag = 'scoped memory for tpu_custom_call.1']
    #allocation9 [shape = 'u8[8192]{0}', space=vmem, size = 0x2000, scoped, tag = 'input window, operand 2, single buffered']
    #allocation10 [shape = 'u8[32768]{0}', space=vmem, size = 0x8000, scoped, tag = 'input window, operand 4, single buffered']
    #allocation11 [shape = 's32[1]{0}', space=sflag, size = 0x4, scoped, tag = 'scoped memory for tpu_custom_call.1']
    #allocation12 [shape = 'u8[16384]{0}', space=vmem, size = 0x4000, scoped, tag = 'output window, operand 0']
    %11 = vsyncpa [#allocation5], 0
    %s12 = scalar_lea.sflag [#allocation5], 1
    %13 = vsyncpa %s12, 0
    %14 = vsyncpa [#allocation8], 0
    %s15 = scalar_lea.sflag [#allocation8], 1
    %16 = vsyncpa %s15, 0
    %17 = vsyncpa [#allocation11], 0
    %18 = vsyncpa [#allocation6], 0
    %s19 = scalar_lea.sflag [#allocation6], 1
    %20 = vsyncpa %s19, 0
    loop: start=0, step=1, limit=4
    $region2: #{tpu_custom_call.1} parent=1 // loop_pre_header
      _
    $region3: #{tpu_custom_call.1} parent=1 // loop_header
      %s22 = sphi 0, %s26
      %p23 = scmp.ge.s32.totalorder %s22, 4
      %s29 = sphi 0, %s41
      %s30 = sphi 0, %s37
      %s31 = sphi 0, %s29
      %s32 = sphi 0, %s30
      %s33 = sphi 0, %s31
      %s34 = sphi 0, %s32
      %s46 = sphi 0, %s48
      %s49 = sphi 0, %s46
      %s50 = sphi 0, %s49
      %s66 = sphi 0, %s50
      %s72 = sphi 0, %s74
      %s75 = sphi 0, %s72
      %s76 = sphi 0, %s75
      %s92 = sphi 0, %s76
      %s96 = sphi 0, %s96
      %s98 = sphi 0, %s96
      %s99 = sphi 0, %s98
      %s113 = sphi 0, %s99
      %s117 = sphi 0, %s117
      %s119 = sphi 0, %s117
      %s120 = sphi 0, %s119
      %s134 = sphi 0, %s120
      %s138 = sphi 0, %s138
      %s140 = sphi 0, %s138
      %s141 = sphi 0, %s140
      %s155 = sphi 0, %s141
      %s159 = sphi 0, %s159
      %s161 = sphi 0, %s159
      %s162 = sphi 0, %s161
      %s176 = sphi 0, %s162
      %s184 = sphi 0, %s186
      %s187 = sphi 0, %s184
      %s188 = sphi 0, %s187
      %s204 = sphi 0, %s188
    $region4: #{tpu_custom_call.1} parent=1 // loop_header_branch
      %25 = sbr.rel (%p23) target = $region8
    $region5: #{tpu_custom_call.1} parent=1 // loop_body
      %s27 = ssub.s32 %s22, 1
      %s28 = ssub.s32 %s22, 2
      %s35 = sadd.s32 1, %s30
      %p36 = scmp.ge.s32.totalorder %s35, 1
      %s37 = scalar_select %p36, 0, %s35
      %s38 = sadd.s32 1, %s29
      %s39 = scalar_select %p36, %s38, %s29
      %p40 = scmp.ge.s32.totalorder %s39, 2
      %s41 = scalar_select %p40, 0, %s39
      %s42 = ssub.s32 %s29, %s41
      %s43 = ssub.s32 %s30, %s37
      %s44 = sor.u32 %s42, %s43
      %p45 = scmp.eq.s32.totalorder %s44, 0
      %s47 = sadd.s32 %s46, 1
      %s48 = scalar_select %p45, %s46, %s47
      %p51 = pneg %p45
      %p52 = scmp.eq.s32.totalorder %s22, 1
      %p53 = por %p51, %p52
      %p54 = scmp.ne.s32.totalorder %s46, %s49
      %p55 = scmp.eq.s32.totalorder %s22, 0
      %p56 = por %p54, %p55
      %p57 = scmp.ne.s32.totalorder %s46, %s49
      %p58 = scmp.eq.s32.totalorder %s27, 1
      %p59 = por %p57, %p58
      %p60 = scmp.ne.s32.totalorder %s49, %s50
      %p61 = scmp.eq.s32.totalorder %s27, 0
      %p62 = por %p60, %p61
      %p63 = scmp.ne.s32.totalorder %s49, %s50
      %p64 = scmp.eq.s32.totalorder %s28, 1
      %p65 = por %p63, %p64
      %p67 = scmp.ne.s32.totalorder %s50, %s66
      %p68 = scmp.eq.s32.totalorder %s28, 0
      %p69 = por %p67, %p68
      %s70 = ssub.s32 %s29, %s41
      %p71 = scmp.eq.s32.totalorder %s70, 0
      %s73 = sadd.s32 %s72, 1
      %s74 = scalar_select %p71, %s72, %s73
      %p77 = pneg %p71
      %p78 = scmp.eq.s32.totalorder %s22, 1
      %p79 = por %p77, %p78
      %p80 = scmp.ne.s32.totalorder %s72, %s75
      %p81 = scmp.eq.s32.totalorder %s22, 0
      %p82 = por %p80, %p81
      %p83 = scmp.ne.s32.totalorder %s72, %s75
      %p84 = scmp.eq.s32.totalorder %s27, 1
      %p85 = por %p83, %p84
      %p86 = scmp.ne.s32.totalorder %s75, %s76
      %p87 = scmp.eq.s32.totalorder %s27, 0
      %p88 = por %p86, %p87
      %p89 = scmp.ne.s32.totalorder %s75, %s76
      %p90 = scmp.eq.s32.totalorder %s28, 1
      %p91 = por %p89, %p90
      %p93 = scmp.ne.s32.totalorder %s76, %s92
      %p94 = scmp.eq.s32.totalorder %s28, 0
      %p95 = por %p93, %p94
      %s97 = sadd.s32 %s96, 1
      %p100 = scmp.eq.s32.totalorder %s22, 1
      %p101 = scmp.ne.s32.totalorder %s96, %s98
      %p102 = scmp.eq.s32.totalorder %s22, 0
      %p103 = por %p101, %p102
      %p104 = scmp.ne.s32.totalorder %s96, %s98
      %p105 = scmp.eq.s32.totalorder %s27, 1
      %p106 = por %p104, %p105
      %p107 = scmp.ne.s32.totalorder %s98, %s99
      %p108 = scmp.eq.s32.totalorder %s27, 0
      %p109 = por %p107, %p108
      %p110 = scmp.ne.s32.totalorder %s98, %s99
      %p111 = scmp.eq.s32.totalorder %s28, 1
      %p112 = por %p110, %p111
      %p114 = scmp.ne.s32.totalorder %s99, %s113
      %p115 = scmp.eq.s32.totalorder %s28, 0
      %p116 = por %p114, %p115
      %s118 = sadd.s32 %s117, 1
      %p121 = scmp.eq.s32.totalorder %s22, 1
      %p122 = scmp.ne.s32.totalorder %s117, %s119
      %p123 = scmp.eq.s32.totalorder %s22, 0
      %p124 = por %p122, %p123
      %p125 = scmp.ne.s32.totalorder %s117, %s119
      %p126 = scmp.eq.s32.totalorder %s27, 1
      %p127 = por %p125, %p126
      %p128 = scmp.ne.s32.totalorder %s119, %s120
      %p129 = scmp.eq.s32.totalorder %s27, 0
      %p130 = por %p128, %p129
      %p131 = scmp.ne.s32.totalorder %s119, %s120
      %p132 = scmp.eq.s32.totalorder %s28, 1
      %p133 = por %p131, %p132
      %p135 = scmp.ne.s32.totalorder %s120, %s134
      %p136 = scmp.eq.s32.totalorder %s28, 0
      %p137 = por %p135, %p136
      %s139 = sadd.s32 %s138, 1
      %p142 = scmp.eq.s32.totalorder %s22, 1
      %p143 = scmp.ne.s32.totalorder %s138, %s140
      %p144 = scmp.eq.s32.totalorder %s22, 0
      %p145 = por %p143, %p144
      %p146 = scmp.ne.s32.totalorder %s138, %s140
      %p147 = scmp.eq.s32.totalorder %s27, 1
      %p148 = por %p146, %p147
      %p149 = scmp.ne.s32.totalorder %s140, %s141
      %p150 = scmp.eq.s32.totalorder %s27, 0
      %p151 = por %p149, %p150
      %p152 = scmp.ne.s32.totalorder %s140, %s141
      %p153 = scmp.eq.s32.totalorder %s28, 1
      %p154 = por %p152, %p153
      %p156 = scmp.ne.s32.totalorder %s141, %s155
      %p157 = scmp.eq.s32.totalorder %s28, 0
      %p158 = por %p156, %p157
      %s160 = sadd.s32 %s159, 1
      %p163 = scmp.eq.s32.totalorder %s22, 1
      %p164 = scmp.ne.s32.totalorder %s159, %s161
      %p165 = scmp.eq.s32.totalorder %s22, 0
      %p166 = por %p164, %p165
      %p167 = scmp.ne.s32.totalorder %s159, %s161
      %p168 = scmp.eq.s32.totalorder %s27, 1
      %p169 = por %p167, %p168
      %p170 = scmp.ne.s32.totalorder %s161, %s162
      %p171 = scmp.eq.s32.totalorder %s27, 0
      %p172 = por %p170, %p171
      %p173 = scmp.ne.s32.totalorder %s161, %s162
      %p174 = scmp.eq.s32.totalorder %s28, 1
      %p175 = por %p173, %p174
      %p177 = scmp.ne.s32.totalorder %s162, %s176
      %p178 = scmp.eq.s32.totalorder %s28, 0
      %p179 = por %p177, %p178
      %s180 = ssub.s32 %s29, %s41
      %s181 = ssub.s32 %s30, %s37
      %s182 = sor.u32 %s180, %s181
      %p183 = scmp.eq.s32.totalorder %s182, 0
      %s185 = sadd.s32 %s184, 1
      %s186 = scalar_select %p183, %s184, %s185
      %p189 = pneg %p183
      %p190 = scmp.eq.s32.totalorder %s22, 1
      %p191 = por %p189, %p190
      %p192 = scmp.ne.s32.totalorder %s184, %s187
      %p193 = scmp.eq.s32.totalorder %s22, 0
      %p194 = por %p192, %p193
      %p195 = scmp.ne.s32.totalorder %s184, %s187
      %p196 = scmp.eq.s32.totalorder %s27, 1
      %p197 = por %p195, %p196
      %p198 = scmp.ne.s32.totalorder %s187, %s188
      %p199 = scmp.eq.s32.totalorder %s27, 0
      %p200 = por %p198, %p199
      %p201 = scmp.ne.s32.totalorder %s187, %s188
      %p202 = scmp.eq.s32.totalorder %s28, 1
      %p203 = por %p201, %p202
      %p205 = scmp.ne.s32.totalorder %s188, %s204
      %p206 = scmp.eq.s32.totalorder %s28, 0
      %p207 = por %p205, %p206
      %p208 = scmp.le.s32.totalorder 1, %s22
      %p209 = scmp.lt.s32.totalorder %s22, 3
      %p210 = pnand %p208, %p209
      %p211 = pneg %p210
      // Predicated region
      $region9: #{tpu_custom_call.1} parent=5 // pred_check
        _
      $region10: #{tpu_custom_call.1} parent=5 // pred_check_branch
        %213 = sbr.rel (%p210) target = $region12
      $region11: #{tpu_custom_call.1} parent=5 // pred_region
        %s214 = ssub.s32 %s22, 1
        // Predicated region
        $region13: #{tpu_custom_call.1} parent=11 // pred_check
          %p215 = pneg %p109
        $region14: #{tpu_custom_call.1} parent=11 // pred_check_branch
          %217 = sbr.rel (%p215) target = $region16
        $region15: #{tpu_custom_call.1} parent=11 // pred_region
          %s219 = ssub.s32 256, 256
          %220 = vsyncadd [#allocation8], %s219
          %s221 = sshll.u32 [#allocation9], 4
          %s222 = int_to_ptr.vmem [resolvable:$true] %s221
          %227 = dma.hbm_to_vmem [thread:$0]  %s2, 256, %s222, [#allocation8], 64, 64, 4
        $region16: #{tpu_custom_call.1} parent=11 // pred_fallthru
          _
        // Predicated region
        $region17: #{tpu_custom_call.1} parent=11 // pred_check
          %p228 = pneg %p130
        $region18: #{tpu_custom_call.1} parent=11 // pred_check_branch
          %230 = sbr.rel (%p228) target = $region20
        $region19: #{tpu_custom_call.1} parent=11 // pred_region
          _
        $region20: #{tpu_custom_call.1} parent=11 // pred_fallthru
          _
        // Predicated region
        $region21: #{tpu_custom_call.1} parent=11 // pred_check
          %p231 = pneg %p151
        $region22: #{tpu_custom_call.1} parent=11 // pred_check_branch
          %233 = sbr.rel (%p231) target = $region24
        $region23: #{tpu_custom_call.1} parent=11 // pred_region
          %s235 = ssub.s32 1024, 1024
          %236 = vsyncadd [#allocation11], %s235
          %s237 = sshll.u32 [#allocation10], 4
          %s238 = int_to_ptr.vmem [resolvable:$true] %s237
          %243 = dma.hbm_to_vmem [thread:$0]  %s4, 1024, %s238, [#allocation11], 128, 128, 8
        $region24: #{tpu_custom_call.1} parent=11 // pred_fallthru
          _
        // Predicated region
        $region25: #{tpu_custom_call.1} parent=11 // pred_check
          %p244 = pneg %p172
        $region26: #{tpu_custom_call.1} parent=11 // pred_check_branch
          %246 = sbr.rel (%p244) target = $region28
        $region27: #{tpu_custom_call.1} parent=11 // pred_region
          _
        $region28: #{tpu_custom_call.1} parent=11 // pred_fallthru
          _
      $region12: #{tpu_custom_call.1} parent=5 // pred_fallthru
        _
      %p247 = scmp.lt.s32.totalorder %s22, 2
      // Predicated region
      $region29: #{tpu_custom_call.1} parent=5 // pred_check
        %p248 = pneg %p247
      $region30: #{tpu_custom_call.1} parent=5 // pred_check_branch
        %250 = sbr.rel (%p248) target = $region32
      $region31: #{tpu_custom_call.1} parent=5 // pred_region
        // Predicated region
        $region33: #{tpu_custom_call.1} parent=31 // pred_check
          %p251 = pneg %p56
        $region34: #{tpu_custom_call.1} parent=31 // pred_check_branch
          %253 = sbr.rel (%p251) target = $region36
        $region35: #{tpu_custom_call.1} parent=31 // pred_region
          %s254 = sand.u32 %s46, 1
          %s255 = scalar_lea.sflag [#allocation5], %s254
          %s256 = sand.u32 %s46, 1
          %s257 = smul.addr %s256, 8
          %s258 = scalar_lea.vmem [#allocation4], %s257
          %s259 = smul.u32 2, %s30
          %s261 = ssub.s32 128, 128
          %262 = vsyncadd %s255, %s261
          %s263 = smul.addr %s29, 2
          %s264 = sadd.s32 %s259, %s263
          %s265 = smul.addr %s264, 64
          %s266 = scalar_lea.hbm %s0, %s265
          %s267 = sshll.u32 %s258, 4
          %s268 = int_to_ptr.vmem [resolvable:$true] %s267
          %273 = dma.hbm_to_vmem [thread:$0]  %s266, 128, %s268, %s255, 64, 64, 4
        $region36: #{tpu_custom_call.1} parent=31 // pred_fallthru
          _
        // Predicated region
        $region37: #{tpu_custom_call.1} parent=31 // pred_check
          %p274 = pneg %p82
        $region38: #{tpu_custom_call.1} parent=31 // pred_check_branch
          %276 = sbr.rel (%p274) target = $region40
        $region39: #{tpu_custom_call.1} parent=31 // pred_region
          %s277 = sand.u32 %s22, 1
          %s278 = scalar_lea.sflag [#allocation8], %s277
          %s279 = sand.u32 %s72, 1
          %s280 = smul.addr %s279, 8
          %s281 = scalar_lea.vmem [#allocation7], %s280
          %s283 = ssub.s32 128, 128
          %284 = vsyncadd %s278, %s283
          %s285 = smul.addr %s29, 2
          %s286 = smul.addr %s285, 64
          %s287 = scalar_lea.hbm %s1, %s286
          %s288 = sshll.u32 %s281, 4
          %s289 = int_to_ptr.vmem [resolvable:$true] %s288
          %294 = dma.hbm_to_vmem [thread:$0]  %s287, 128, %s289, %s278, 64, 64, 4
        $region40: #{tpu_custom_call.1} parent=31 // pred_fallthru
          _
      $region32: #{tpu_custom_call.1} parent=5 // pred_fallthru
        _
      %p295 = scmp.le.s32.totalorder 1, %s22
      %p296 = scmp.lt.s32.totalorder %s22, 3
      %p297 = pnand %p295, %p296
      %p298 = pneg %p297
      // Predicated region
      $region41: #{tpu_custom_call.1} parent=5 // pred_check
        _
      $region42: #{tpu_custom_call.1} parent=5 // pred_check_branch
        %300 = sbr.rel (%p297) target = $region44
      $region43: #{tpu_custom_call.1} parent=5 // pred_region
        %s301 = ssub.s32 %s22, 1
        %s302 = sand.u32 %s49, 1
        %s303 = scalar_lea.sflag [#allocation5], %s302
        %s304 = sand.u32 %s49, 1
        %s305 = smul.addr %s304, 8
        %s306 = scalar_lea.vmem [#allocation4], %s305
        // Predicated region
        $region45: #{tpu_custom_call.1} parent=43 // pred_check
          %p307 = pneg %p62
        $region46: #{tpu_custom_call.1} parent=43 // pred_check_branch
          %309 = sbr.rel (%p307) target = $region48
        $region47: #{tpu_custom_call.1} parent=43 // pred_region
          %310 = dma.done %s303, 128
        $region48: #{tpu_custom_call.1} parent=43 // pred_fallthru
          _
        %s311 = sand.u32 %s27, 1
        %s312 = scalar_lea.sflag [#allocation8], %s311
        %s313 = sand.u32 %s75, 1
        %s314 = smul.addr %s313, 8
        %s315 = scalar_lea.vmem [#allocation7], %s314
        // Predicated region
        $region49: #{tpu_custom_call.1} parent=43 // pred_check
          %p316 = pneg %p88
        $region50: #{tpu_custom_call.1} parent=43 // pred_check_branch
          %318 = sbr.rel (%p316) target = $region52
        $region51: #{tpu_custom_call.1} parent=43 // pred_region
          %319 = dma.done %s312, 128
        $region52: #{tpu_custom_call.1} parent=43 // pred_fallthru
          _
        // Predicated region
        $region53: #{tpu_custom_call.1} parent=43 // pred_check
          %p320 = pneg %p109
        $region54: #{tpu_custom_call.1} parent=43 // pred_check_branch
          %322 = sbr.rel (%p320) target = $region56
        $region55: #{tpu_custom_call.1} parent=43 // pred_region
          %323 = dma.done [#allocation8], 256
        $region56: #{tpu_custom_call.1} parent=43 // pred_fallthru
          _
        // Predicated region
        $region57: #{tpu_custom_call.1} parent=43 // pred_check
          %p324 = pneg %p151
        $region58: #{tpu_custom_call.1} parent=43 // pred_check_branch
          %326 = sbr.rel (%p324) target = $region60
        $region59: #{tpu_custom_call.1} parent=43 // pred_region
          %327 = dma.done [#allocation11], 1024
        $region60: #{tpu_custom_call.1} parent=43 // pred_fallthru
          _
        %s328 = sand.u32 %s49, 1
        %s329 = scalar_lea.sflag [#allocation5], %s328
        %s330 = sand.u32 %s49, 1
        %s331 = smul.addr %s330, 8
        %s332 = scalar_lea.vmem [#allocation4], %s331
        %p333 = pneg %p62
        %p334 = pneg %p59
        %s335 = sand.u32 %s27, 1
        %s336 = scalar_lea.sflag [#allocation8], %s335
        %s337 = sand.u32 %s75, 1
        %s338 = smul.addr %s337, 8
        %s339 = scalar_lea.vmem [#allocation7], %s338
        %p340 = pneg %p88
        %p341 = pneg %p85
        %p342 = pneg %p109
        %p343 = pneg %p106
        %p344 = pneg %p130
        %p345 = pneg %p127
        %p346 = pneg %p151
        %p347 = pneg %p148
        %p348 = pneg %p172
        %p349 = pneg %p169
        %p350 = pneg %p200
        %p351 = pneg %p197
        %s352 = sand.u32 %s187, 1
        %s353 = scalar_lea.sflag [#allocation6], %s352
        %s354 = sand.u32 %s187, 1
        %s355 = smul.addr %s354, 16
        %s356 = scalar_lea.vmem [#allocation12], %s355
        %s357 = smul.u32 2, %s32
        %s358 = smul.u32 2, %s32
        %p360 = scmp.eq.s32.totalorder %s32, 0
        // Predicated region
        $region61: #{tpu_custom_call.1} parent=43 // pred_check
          %p361 = pneg %p360
        $region62: #{tpu_custom_call.1} parent=43 // pred_check_branch
          %363 = sbr.rel (%p361) target = $region64
        $region63: #{tpu_custom_call.1} parent=43 // pred_region
          %v364 = vld [vmem:[%s315] sm:$0xf]
          %v365 = vld [vmem:[%s315 + $0x4] sm:$0xf]
          %v366 = vld [vmem:[#allocation10] sm:$0xff]
          %v367 = vld [vmem:[#allocation10 + $0x8] sm:$0xff]
          %v368 = vld [vmem:[#allocation10 + $0x10] sm:$0xff]
          %v369 = vld [vmem:[#allocation10 + $0x18] sm:$0xff]
          %v370 = vld [vmem:[#allocation10 + $0x20] sm:$0xff]
          %v371 = vld [vmem:[#allocation10 + $0x28] sm:$0xff]
          %v372 = vld [vmem:[#allocation10 + $0x30] sm:$0xff]
          %v373 = vld [vmem:[#allocation10 + $0x38] sm:$0xff]
          %v374 = vld [vmem:[%s5] sm:$0x3]
          %v376 = vlaneseq
          %v377 = vshrl.u32 %v376, 7
          %v378 = vsub.s32 0, %v377
          %v379 = vrot.slane %v374, %v378
          %v380 = vlaneseq
          %v381 = vshrl.u32 %v380, 7
          %v382 = vsub.s32 1, %v381
          %v383 = vrot.slane %v374, %v382
          %v388 = vunpack.c.l.b16 %v364
          %v389 = vunpack.c.l.b16 %v365
          %v390 = vpack.c.b16 %v389, %v388
          %v399 = vunpack.c.l.b16 %v366
          %v400 = vunpack.c.h.b16 %v366
          %v401 = vunpack.c.l.b16 %v367
          %v402 = vunpack.c.h.b16 %v367
          %v403 = vunpack.c.l.b16 %v368
          %v404 = vunpack.c.h.b16 %v368
          %v405 = vunpack.c.l.b16 %v369
          %v406 = vunpack.c.h.b16 %v369
          %v407 = vunpack.c.l.b16 %v370
          %v408 = vunpack.c.h.b16 %v370
          %v409 = vunpack.c.l.b16 %v371
          %v410 = vunpack.c.h.b16 %v371
          %v411 = vunpack.c.l.b16 %v372
          %v412 = vunpack.c.h.b16 %v372
          %v413 = vunpack.c.l.b16 %v373
          %v414 = vunpack.c.h.b16 %v373
          %v415 = vpack.c.b16 %v401, %v399
          %v416 = vpack.c.b16 %v402, %v400
          %v417 = vpack.c.b16 %v405, %v403
          %v418 = vpack.c.b16 %v406, %v404
          %v419 = vpack.c.b16 %v409, %v407
          %v420 = vpack.c.b16 %v410, %v408
          %v421 = vpack.c.b16 %v413, %v411
          %v422 = vpack.c.b16 %v414, %v412
          %vm431 = vcmask 523264
          %v433 = vsel %vm431, %v390, 0
          %435 = vmatprep.subr.bf16.mxu0 %v416
          %436 = vmatpush1.bf16.msra.mxu0 %v415
          %437 = vmatprep.subr.bf16.mxu0 %v418
          %438 = vmatpush1.bf16.msra.mxu0 %v417
          %439 = vmatprep.subr.bf16.mxu0 %v420
          %440 = vmatpush1.bf16.msra.mxu0 %v419
          %441 = vmatprep.subr.bf16.mxu0 %v422
          %442 = vmatpush1.bf16.msra.mxu0 %v421
          %443 = vmatprep.subr.bf16.mxu0 0
          %444 = vmatpush1.bf16.msra.mxu0 0
          %445 = vmatprep.subr.bf16.mxu0 0
          %446 = vmatpush1.bf16.msra.mxu0 0
          %447 = vmatprep.subr.bf16.mxu0 0
          %448 = vmatpush1.bf16.msra.mxu0 0
          %449 = vmatprep.subr.bf16.mxu0 0
          %450 = vmatpush1.bf16.msra.mxu0 0
          %451 = vmatprep.subr.bf16.mxu0 0
          %452 = vmatpush1.bf16.msra.mxu0 0
          %453 = vmatprep.subr.bf16.mxu0 0
          %454 = vmatpush1.bf16.msra.mxu0 0
          %455 = vmatprep.subr.bf16.mxu0 0
          %456 = vmatpush1.bf16.msra.mxu0 0
          %457 = vmatprep.subr.bf16.mxu0 0
          %458 = vmatpush1.bf16.msra.mxu0 0
          %459 = vmatprep.subr.bf16.mxu0 0
          %460 = vmatpush1.bf16.msra.mxu0 0
          %461 = vmatprep.subr.bf16.mxu0 0
          %462 = vmatpush1.bf16.msra.mxu0 0
          %463 = vmatprep.subr.bf16.mxu0 0
          %464 = vmatpush1.bf16.msra.mxu0 0
          %465 = vmatprep.subr.bf16.mxu0 0
          %466 = vmatpush1.bf16.msra.mxu0 0
          %467 = vmatprep.mubr.bf16.mxu0 0
          %468 = vmatmul.mubr.bf16.gmra.mrb[0].mxu0 %v433
          %v469 = vpop.f32.mrb[0].mxu0
          %v470 = vadd.f32 %v379, %v469
          %v471 = vpop.f32.mrb[0].mxu0
          %v472 = vadd.f32 %v383, %v471
          %v473 = vpop.f32.mrb[0].mxu0
          %v474 = vadd.f32 %v379, %v473
          %v475 = vpop.f32.mrb[0].mxu0
          %v476 = vadd.f32 %v383, %v475
          %477 = vdwg.mxu0
          %v478 = vpack.c.bf16 %v474, %v470
          %479 = vst [vmem:[#allocation2] sm:$0xff] %v478
          %v480 = vpack.c.bf16 %v476, %v472
          %481 = vst [vmem:[#allocation3] sm:$0xff] %v480
        $region64: #{tpu_custom_call.1} parent=43 // pred_fallthru
          _
        %v482 = vld [vmem:[%s306] sm:$0xf]
        %v483 = vld [vmem:[%s306 + $0x4] sm:$0xf]
        %v484 = vld [vmem:[#allocation9] sm:$0xf]
        %v485 = vld [vmem:[#allocation9 + $0x4] sm:$0xf]
        %v486 = vld [vmem:[#allocation9 + $0x8] sm:$0xf]
        %v487 = vld [vmem:[#allocation9 + $0xc] sm:$0xf]
        %v488 = vld [vmem:[%s3] sm:$0x1]
        %v490 = vlaneseq
        %v491 = vshrl.u32 %v490, 7
        %v492 = vsub.s32 0, %v491
        %v493 = vrot.slane %v488, %v492
        %v497 = vunpack.c.l.b16 %v482
        %v498 = vunpack.c.l.b16 %v483
        %v499 = vpack.c.b16 %v498, %v497
        %v504 = vunpack.c.l.b16 %v484
        %v505 = vunpack.c.l.b16 %v485
        %v506 = vunpack.c.l.b16 %v486
        %v507 = vunpack.c.l.b16 %v487
        %v508 = vpack.c.b16 %v505, %v504
        %v509 = vpack.c.b16 %v507, %v506
        %vm512 = vcmask 261120
        %v514 = vsel %vm512, %v499, 0
        %516 = vmatprep.subr.bf16.mxu0 0
        %517 = vmatpush1.bf16.msra.mxu0 %v508
        %518 = vmatprep.subr.bf16.mxu0 0
        %519 = vmatpush1.bf16.msra.mxu0 %v509
        %520 = vmatprep.subr.bf16.mxu0 0
        %521 = vmatpush1.bf16.msra.mxu0 0
        %522 = vmatprep.subr.bf16.mxu0 0
        %523 = vmatpush1.bf16.msra.mxu0 0
        %524 = vmatprep.subr.bf16.mxu0 0
        %525 = vmatpush1.bf16.msra.mxu0 0
        %526 = vmatprep.subr.bf16.mxu0 0
        %527 = vmatpush1.bf16.msra.mxu0 0
        %528 = vmatprep.subr.bf16.mxu0 0
        %529 = vmatpush1.bf16.msra.mxu0 0
        %530 = vmatprep.subr.bf16.mxu0 0
        %531 = vmatpush1.bf16.msra.mxu0 0
        %532 = vmatprep.subr.bf16.mxu0 0
        %533 = vmatpush1.bf16.msra.mxu0 0
        %534 = vmatprep.subr.bf16.mxu0 0
        %535 = vmatpush1.bf16.msra.mxu0 0
        %536 = vmatprep.subr.bf16.mxu0 0
        %537 = vmatpush1.bf16.msra.mxu0 0
        %538 = vmatprep.subr.bf16.mxu0 0
        %539 = vmatpush1.bf16.msra.mxu0 0
        %540 = vmatprep.subr.bf16.mxu0 0
        %541 = vmatpush1.bf16.msra.mxu0 0
        %542 = vmatprep.subr.bf16.mxu0 0
        %543 = vmatpush1.bf16.msra.mxu0 0
        %544 = vmatprep.subr.bf16.mxu0 0
        %545 = vmatpush1.bf16.msra.mxu0 0
        %546 = vmatprep.subr.bf16.mxu0 0
        %547 = vmatpush1.bf16.msra.mxu0 0
        %548 = vmatprep.mubr.bf16.mxu0 0
        %549 = vmatmul.mubr.bf16.gmra.mrb[0].mxu0 %v514
        %v550 = vpop.f32.mrb[0].mxu0
        %v551 = vadd.f32 %v493, %v550
        %v552 = vpop.f32.mrb[0].mxu0
        %v553 = vpop.f32.mrb[0].mxu0
        %v554 = vadd.f32 %v493, %v553
        %v555 = vpop.f32.mrb[0].mxu0
        %556 = vdwg.mxu0
        %v557 = vmul.f32 %v551, 0.088388346
        %v558 = vmul.f32 %v554, 0.088388346
        %v559 = vpack.c.bf16 %v558, %v557
        %v560 = vld [vmem:[#allocation2] sm:$0xff]
        %561 = vmatprep.subr.bf16.mxu0 0
        %562 = vmatpush1.bf16.xpose.msra.mxu0 %v560
        %563 = vmatprep.subr.bf16.mxu0 0
        %564 = vmatpush1.bf16.xpose.msra.mxu0 0
        %565 = vmatprep.subr.bf16.mxu0 0
        %566 = vmatpush1.bf16.xpose.msra.mxu0 0
        %567 = vmatprep.subr.bf16.mxu0 0
        %568 = vmatpush1.bf16.xpose.msra.mxu0 0
        %569 = vmatprep.subr.bf16.mxu0 0
        %570 = vmatpush1.bf16.xpose.msra.mxu0 0
        %571 = vmatprep.subr.bf16.mxu0 0
        %572 = vmatpush1.bf16.xpose.msra.mxu0 0
        %573 = vmatprep.subr.bf16.mxu0 0
        %574 = vmatpush1.bf16.xpose.msra.mxu0 0
        %575 = vmatprep.subr.bf16.mxu0 0
        %576 = vmatpush1.bf16.xpose.msra.mxu0 0
        %577 = vmatprep.subr.bf16.mxu0 0
        %578 = vmatpush1.bf16.xpose.msra.mxu0 0
        %579 = vmatprep.subr.bf16.mxu0 0
        %580 = vmatpush1.bf16.xpose.msra.mxu0 0
        %581 = vmatprep.subr.bf16.mxu0 0
        %582 = vmatpush1.bf16.xpose.msra.mxu0 0
        %583 = vmatprep.subr.bf16.mxu0 0
        %584 = vmatpush1.bf16.xpose.msra.mxu0 0
        %585 = vmatprep.subr.bf16.mxu0 0
        %586 = vmatpush1.bf16.xpose.msra.mxu0 0
        %587 = vmatprep.subr.bf16.mxu0 0
        %588 = vmatpush1.bf16.xpose.msra.mxu0 0
        %589 = vmatprep.subr.bf16.mxu0 0
        %590 = vmatpush1.bf16.xpose.msra.mxu0 0
        %591 = vmatprep.subr.bf16.mxu0 0
        %592 = vmatpush1.bf16.xpose.msra.mxu0 0
        %593 = vmatprep.mubr.bf16.mxu0 0
        %594 = vmatmul.mubr.bf16.gmra.mrb[0].mxu0 %v559
        %v595 = vpop.f32.mrb[0].mxu0
        %v596 = vadd.f32 0.0, %v595
        %v597 = vpop.f32.mrb[0].mxu0
        %v598 = vpop.f32.mrb[0].mxu0
        %v599 = vadd.f32 0.0, %v598
        %v600 = vpop.f32.mrb[0].mxu0
        %601 = vdwg.mxu0
        %vm602 = vcmask 130048
        %v603 = vsel %vm602, %v596, -inf
        %604 = vmax.xlane.f32.xlu0 %v603
        %v605 = vpop.xlane.xlu0 %604
        %v606 = vsel %vm602, %v599, -inf
        %607 = vmax.xlane.f32.xlu0 %v606
        %v608 = vpop.xlane.xlu0 %607
        %v609 = vsub.f32 %v596, %v605
        %v610 = vsub.f32 %v599, %v608
        %v611 = vmul.f32 %v609, 1.442695
        %v612 = vpow.pop %v611
        %v613 = vmul.f32 %v610, 1.442695
        %v614 = vpow.pop %v613
        %v615 = vsel %vm602, %v612, 0.0
        %616 = vadd.xlane.f32.xlu0 %v615
        %v617 = vpop.xlane.xlu0 %616
        %v618 = vsel %vm602, %v614, 0.0
        %619 = vadd.xlane.f32.xlu0 %v618
        %v620 = vpop.xlane.xlu0 %619
        %v621 = vpack.c.bf16 %v614, %v612
        %v622 = vld [vmem:[#allocation3] sm:$0xff]
        %v624 = vsel %vm602, %v621, 0
        %626 = vmatprep.subr.bf16.mxu0 0
        %627 = vmatpush1.bf16.msra.mxu0 %v622
        %628 = vmatprep.subr.bf16.mxu0 0
        %629 = vmatpush1.bf16.msra.mxu0 0
        %630 = vmatprep.subr.bf16.mxu0 0
        %631 = vmatpush1.bf16.msra.mxu0 0
        %632 = vmatprep.subr.bf16.mxu0 0
        %633 = vmatpush1.bf16.msra.mxu0 0
        %634 = vmatprep.subr.bf16.mxu0 0
        %635 = vmatpush1.bf16.msra.mxu0 0
        %636 = vmatprep.subr.bf16.mxu0 0
        %637 = vmatpush1.bf16.msra.mxu0 0
        %638 = vmatprep.subr.bf16.mxu0 0
        %639 = vmatpush1.bf16.msra.mxu0 0
        %640 = vmatprep.subr.bf16.mxu0 0
        %641 = vmatpush1.bf16.msra.mxu0 0
        %642 = vmatprep.subr.bf16.mxu0 0
        %643 = vmatpush1.bf16.msra.mxu0 0
        %644 = vmatprep.subr.bf16.mxu0 0
        %645 = vmatpush1.bf16.msra.mxu0 0
        %646 = vmatprep.subr.bf16.mxu0 0
        %647 = vmatpush1.bf16.msra.mxu0 0
        %648 = vmatprep.subr.bf16.mxu0 0
        %649 = vmatpush1.bf16.msra.mxu0 0
        %650 = vmatprep.subr.bf16.mxu0 0
        %651 = vmatpush1.bf16.msra.mxu0 0
        %652 = vmatprep.subr.bf16.mxu0 0
        %653 = vmatpush1.bf16.msra.mxu0 0
        %654 = vmatprep.subr.bf16.mxu0 0
        %655 = vmatpush1.bf16.msra.mxu0 0
        %656 = vmatprep.subr.bf16.mxu0 0
        %657 = vmatpush1.bf16.msra.mxu0 0
        %658 = vmatprep.mubr.bf16.mxu0 0
        %659 = vmatmul.mubr.bf16.gmra.mrb[0].mxu0 %v624
        %v660 = vpop.f32.mrb[0].mxu0
        %v661 = vadd.f32 0.0, %v660
        %v662 = vpop.f32.mrb[0].mxu0
        %v663 = vpop.f32.mrb[0].mxu0
        %v664 = vadd.f32 0.0, %v663
        %v665 = vpop.f32.mrb[0].mxu0
        %666 = vdwg.mxu0
        %v667 = vrcp.pop %v617
        %v668 = vrcp.pop %v620
        %v669 = vmul.f32 %v661, %v667
        %v670 = vmul.f32 %v664, %v668
        %671 = vst [vmem:[%s356] sm:$0xff] %v669
        %672 = vst [vmem:[%s356 + $0x8] sm:$0xff] %v670
        %s673 = sand.u32 %s187, 1
        %s674 = scalar_lea.sflag [#allocation6], %s673
        %s675 = sand.u32 %s187, 1
        %s676 = smul.addr %s675, 16
        %s677 = scalar_lea.vmem [#allocation12], %s676
        // Predicated region
        $region65: #{tpu_custom_call.1} parent=43 // pred_check
          %p678 = pneg %p197
        $region66: #{tpu_custom_call.1} parent=43 // pred_check_branch
          %680 = sbr.rel (%p678) target = $region68
        $region67: #{tpu_custom_call.1} parent=43 // pred_region
          %s681 = smul.u32 2, %s32
          %s683 = ssub.s32 256, 256
          %684 = vsyncadd %s674, %s683
          %s685 = smul.addr %s31, 2
          %s686 = sadd.s32 %s681, %s685
          %s687 = smul.addr %s686, 128
          %s688 = scalar_lea.hbm %s6, %s687
          %s689 = sshll.u32 %s677, 4
          %s690 = int_to_ptr.vmem [resolvable:$true] %s689
          %695 = dma.vmem_to_hbm [thread:$0]  %s690, 256, %s688, %s674, 128, 128, 8
        $region68: #{tpu_custom_call.1} parent=43 // pred_fallthru
          _
      $region44: #{tpu_custom_call.1} parent=5 // pred_fallthru
        _
      %p696 = scmp.le.s32.totalorder 2, %s22
      // Predicated region
      $region69: #{tpu_custom_call.1} parent=5 // pred_check
        %p697 = pneg %p696
      $region70: #{tpu_custom_call.1} parent=5 // pred_check_branch
        %699 = sbr.rel (%p697) target = $region72
      $region71: #{tpu_custom_call.1} parent=5 // pred_region
        %s700 = ssub.s32 %s22, 2
        // Predicated region
        $region73: #{tpu_custom_call.1} parent=71 // pred_check
          %p701 = pneg %p203
        $region74: #{tpu_custom_call.1} parent=71 // pred_check_branch
          %703 = sbr.rel (%p701) target = $region76
        $region75: #{tpu_custom_call.1} parent=71 // pred_region
          %s704 = sand.u32 %s188, 1
          %s705 = scalar_lea.sflag [#allocation6], %s704
          %s706 = sand.u32 %s188, 1
          %s707 = smul.addr %s706, 16
          %s708 = scalar_lea.vmem [#allocation12], %s707
          %709 = dma.done %s705, 256
        $region76: #{tpu_custom_call.1} parent=71 // pred_fallthru
          _
      $region72: #{tpu_custom_call.1} parent=5 // pred_fallthru
        _
    $region6: #{tpu_custom_call.1} parent=1 // loop_footer
      %s26 = sadd.s32 1, %s22
    $region7: #{tpu_custom_call.1} parent=1 // loop_footer_branch
      %21 = sbr.rel target = $region3
    $region8: #{tpu_custom_call.1} parent=1 // loop_exit
      _
    %710 = vsyncpa [#allocation5], 1
    %s711 = scalar_lea.sflag [#allocation5], 1
    %712 = vsyncpa %s711, 1
    %713 = vsyncpa [#allocation8], 1
    %s714 = scalar_lea.sflag [#allocation8], 1
    %715 = vsyncpa %s714, 1
    %716 = vsyncpa [#allocation11], 1
    %717 = vsyncpa [#allocation6], 1
    %s718 = scalar_lea.sflag [#allocation6], 1
    %719 = vsyncpa %s718, 1

</llo_original>
